<compile_context>
chip_gen: v5e
topology: v5e:2x2
jax: 0.10.0
libtpu: 0.0.40
codegen_flags: <defaults>
</compile_context>

<pallas_src>
import jax
import jax.numpy as jnp
from jax.experimental import pallas as pl
from jax.experimental.pallas import tpu as pltpu


def _decoder_text_kernel(atten_ref, conv_ref, w_ref, b_ref, out_ref):
    # atten_ref: (B_blk, K, HW)      conv_ref: (B_blk, C, HW)
    # w_ref    : (nclass, C)  (PyTorch nn.Linear layout)   b_ref: (1, nclass)
    a = atten_ref[...]
    c = conv_ref[...]
    # Batched bmm for this batch block: contract over HW -> (B_blk, K, C),
    # f32 accumulation on the MXU.
    atten_out = jax.lax.dot_general(
        a, c,
        dimension_numbers=(((2,), (2,)), ((0,), (0,))),
        preferred_element_type=jnp.float32)
    b_blk, k, cdim = atten_out.shape
    # Stack the batch block so the fc matmul runs ONCE with M = B_blk*K rows
    # (raises MXU row utilization ~B_blk x and reuses the resident weight tile).
    stacked = atten_out.reshape(b_blk * k, cdim).astype(w_ref.dtype)
    logits = jax.lax.dot_general(
        stacked, w_ref[...],
        dimension_numbers=(((1,), (1,)), ((), ())),
        preferred_element_type=jnp.float32)
    logits = logits + b_ref[...].astype(jnp.float32)
    out_ref[...] = logits.reshape(b_blk, k, -1).astype(out_ref.dtype)


def _pick_batch_block(batch, max_blk=8, min_steps=2):
    """Largest divisor of `batch` <= max_blk that still leaves >= min_steps grid
    steps (keeps both v7x TensorCores busy while amortizing per-step overhead)."""
    best = 1
    for cand in range(2, min(max_blk, batch) + 1):
        if batch % cand == 0 and batch // cand >= min_steps:
            best = cand
    return best


def decoder_text(atten, conv_out, fc_weight, fc_bias, *, batch_block=None):
    """Pallas implementation of DecoderText.forward.

    atten     : (B, K, H, W)   (any trailing dims with prod == H*W of conv_out)
    conv_out  : (B, C, H, W)
    fc_weight : (nclass, C)    -- PyTorch nn.Linear weight layout
    fc_bias   : (nclass,)
    returns   : (B, K, nclass) in the promoted input dtype (f32 accumulation
                inside the kernel).
    """
    B, C = conv_out.shape[0], conv_out.shape[1]
    K = atten.shape[1]
    hw = 1
    for d in conv_out.shape[2:]:
        hw *= d
    nclass = fc_bias.shape[0]

    # Free, contiguous reshapes only -- NO dtype casts in the wrapper.
    atten2 = atten.reshape(B, K, hw)
    conv2 = conv_out.reshape(B, C, hw)
    w = fc_weight
    bvec = fc_bias.reshape(1, nclass)

    out_dtype = jnp.result_type(atten.dtype, conv_out.dtype, fc_weight.dtype)

    b_blk = batch_block if batch_block is not None else _pick_batch_block(B)
    assert B % b_blk == 0, (B, b_blk)
    n_steps = B // b_blk

    def _nbytes(x):
        return x.size * jnp.dtype(x.dtype).itemsize

    cost = pl.CostEstimate(
        flops=2 * B * (K * hw * C + K * C * nclass),
        transcendentals=0,
        bytes_accessed=(_nbytes(atten2) + _nbytes(conv2) + _nbytes(w)
                        + _nbytes(bvec)
                        + B * K * nclass * jnp.dtype(out_dtype).itemsize),
    )

    return pl.pallas_call(
        _decoder_text_kernel,
        out_shape=jax.ShapeDtypeStruct((B, K, nclass), out_dtype),
        grid=(n_steps,),
        in_specs=[
            pl.BlockSpec((b_blk, K, hw), lambda i: (i, 0, 0)),   # atten batch block
            pl.BlockSpec((b_blk, C, hw), lambda i: (i, 0, 0)),   # conv batch block
            pl.BlockSpec((nclass, C), lambda i: (0, 0)),         # shared fc weight
            pl.BlockSpec((1, nclass), lambda i: (0, 0)),         # shared fc bias
        ],
        out_specs=pl.BlockSpec((b_blk, K, nclass), lambda i: (i, 0, 0)),
        compiler_params=pltpu.CompilerParams(
            dimension_semantics=("parallel",)),
        cost_estimate=cost,
    )(atten2, conv2, w, bvec)


if __name__ == "__main__":
    key = jax.random.PRNGKey(0)
    k_a, k_c, k_w, k_b = jax.random.split(key, 4)

    # Shapes consistent with the module: K=8 attention maps over an 8x8 feature
    # map, input_dim=256 channels, nclass=36.  Inputs are bf16 (native MXU
    # dtype) and the wrapper does NOT upcast them.
    B, K, C, H, W, nclass = 2, 8, 256, 8, 8, 36

    atten = jax.nn.softmax(
        jax.random.normal(k_a, (B, K, H, W), jnp.float32), axis=1
    ).astype(jnp.bfloat16)
    conv_out = jax.random.normal(k_c, (B, C, H, W), jnp.float32).astype(jnp.bfloat16)
    fc_weight = (jax.random.normal(k_w, (nclass, C), jnp.float32)
                 / (C ** 0.5)).astype(jnp.bfloat16)
    fc_bias = (jax.random.normal(k_b, (nclass,), jnp.float32) * 0.01
               ).astype(jnp.bfloat16)

    p_text = decoder_text(atten, conv_out, fc_weight, fc_bias)
    p_text = jax.block_until_ready(p_text)

    # Pure-JAX f32 reference (same math as the PyTorch forward) on the same
    # bf16 inputs.
    a2 = atten.astype(jnp.float32).reshape(B, K, H * W)
    c2 = conv_out.astype(jnp.float32).reshape(B, C, H * W)
    ref = jnp.einsum('bkp,bcp->bkc', a2, c2)
    ref = jnp.einsum('bkc,nc->bkn', ref, fc_weight.astype(jnp.float32))
    ref = ref + fc_bias.astype(jnp.float32)

    assert p_text.shape == (B, K, nclass), p_text.shape
    out_f32 = p_text.astype(jnp.float32)
    assert bool(jnp.all(jnp.isfinite(out_f32)))
    assert bool(jnp.allclose(out_f32, ref, atol=5e-2, rtol=5e-2))
    print("KERNEL_OK")
</pallas_src>

<mosaic_0001>
module attributes {stable_mosaic.version = 11 : i64} {
  func.func @_decoder_text_kernel(%arg0: i32, %arg1: memref<1x8x64xbf16, #tpu.memory_space<vmem>>, %arg2: memref<1x256x64xbf16, #tpu.memory_space<vmem>>, %arg3: memref<36x256xbf16, #tpu.memory_space<vmem>>, %arg4: memref<1x36xbf16, #tpu.memory_space<vmem>>, %arg5: memref<1x8x36xbf16, #tpu.memory_space<vmem>>) attributes {dimension_semantics = [#tpu.dimension_semantics<parallel>], iteration_bounds = array<i64: 2>, scalar_prefetch = 0 : i64, scratch_operands = 0 : i64, tpu.core_type = #tpu.core_type<tc>, window_params = [{transform_indices = @transform_0, window_bounds = array<i64: 1, 8, 64>}, {transform_indices = @transform_1, window_bounds = array<i64: 1, 256, 64>}, {pipeline_mode = #tpu.pipeline_mode<synchronous>, transform_indices = @transform_2, window_bounds = array<i64: 36, 256>}, {pipeline_mode = #tpu.pipeline_mode<synchronous>, transform_indices = @transform_3, window_bounds = array<i64: 1, 36>}, {transform_indices = @transform_4, window_bounds = array<i64: 1, 8, 36>}]} {
    %c0 = arith.constant 0 : index
    %c0_0 = arith.constant 0 : index
    %c0_1 = arith.constant 0 : index
    %0 = vector.load %arg1[%c0, %c0_0, %c0_1] : memref<1x8x64xbf16, #tpu.memory_space<vmem>>, vector<1x8x64xbf16>
    %c0_2 = arith.constant 0 : index
    %c0_3 = arith.constant 0 : index
    %c0_4 = arith.constant 0 : index
    %1 = vector.load %arg2[%c0_2, %c0_3, %c0_4] : memref<1x256x64xbf16, #tpu.memory_space<vmem>>, vector<1x256x64xbf16>
    %cst = arith.constant dense<0.000000e+00> : vector<1x8x256xf32>
    %2 = tpu.matmul %0, %1, %cst {dimension_numbers = #tpu.dot_dimension_numbers<[2], [2], [1], [1], [0, 0, 0, 1, 1, 1], [0], [0]>} : vector<1x8x64xbf16>, vector<1x256x64xbf16>, vector<1x8x256xf32> -> vector<1x8x256xf32>
    %3 = vector.shape_cast %2 : vector<1x8x256xf32> to vector<8x256xf32>
    %4 = arith.truncf %3 : vector<8x256xf32> to vector<8x256xbf16>
    %c0_5 = arith.constant 0 : index
    %c0_6 = arith.constant 0 : index
    %5 = vector.load %arg3[%c0_5, %c0_6] : memref<36x256xbf16, #tpu.memory_space<vmem>>, vector<36x256xbf16>
    %cst_7 = arith.constant dense<0.000000e+00> : vector<8x36xf32>
    %6 = tpu.matmul %4, %5, %cst_7 {dimension_numbers = #tpu.dot_dimension_numbers<[1], [1], [0], [0], [0, 0, 1, 0], [], []>} : vector<8x256xbf16>, vector<36x256xbf16>, vector<8x36xf32> -> vector<8x36xf32>
    %c0_8 = arith.constant 0 : index
    %c0_9 = arith.constant 0 : index
    %7 = vector.load %arg4[%c0_8, %c0_9] : memref<1x36xbf16, #tpu.memory_space<vmem>>, vector<1x36xbf16>
    %8 = arith.extf %7 : vector<1x36xbf16> to vector<1x36xf32>
    %9 = vector.broadcast %8 : vector<1x36xf32> to vector<8x36xf32>
    %10 = arith.addf %6, %9 : vector<8x36xf32>
    %11 = vector.shape_cast %10 : vector<8x36xf32> to vector<1x8x36xf32>
    %12 = arith.truncf %11 : vector<1x8x36xf32> to vector<1x8x36xbf16>
    %c0_10 = arith.constant 0 : index
    %c0_11 = arith.constant 0 : index
    %c0_12 = arith.constant 0 : index
    %13 = vector.load %arg5[%c0_10, %c0_11, %c0_12] : memref<1x8x36xbf16, #tpu.memory_space<vmem>>, vector<1x8x36xbf16>
    tpu.vector_store %arg5[%c0_10, %c0_11, %c0_12], %12 {strides = array<i32>} : memref<1x8x36xbf16, #tpu.memory_space<vmem>>, vector<1x8x36xbf16>,
    return
  }
  func.func @transform_0(%arg0: i32) -> (i32, i32, i32) {
    %c0_i32 = arith.constant 0 : i32
    %c0_i32_0 = arith.constant 0 : i32
    %c0_i32_1 = arith.constant 0 : i32
    return %arg0, %c0_i32, %c0_i32_0 : i32, i32, i32
  }
  func.func @transform_1(%arg0: i32) -> (i32, i32, i32) {
    %c0_i32 = arith.constant 0 : i32
    %c0_i32_0 = arith.constant 0 : i32
    %c0_i32_1 = arith.constant 0 : i32
    return %arg0, %c0_i32, %c0_i32_0 : i32, i32, i32
  }
  func.func @transform_2(%arg0: i32) -> (i32, i32) {
    %c0_i32 = arith.constant 0 : i32
    %c0_i32_0 = arith.constant 0 : i32
    %c0_i32_1 = arith.constant 0 : i32
    return %c0_i32, %c0_i32_0 : i32, i32
  }
  func.func @transform_3(%arg0: i32) -> (i32, i32) {
    %c0_i32 = arith.constant 0 : i32
    %c0_i32_0 = arith.constant 0 : i32
    %c0_i32_1 = arith.constant 0 : i32
    return %c0_i32, %c0_i32_0 : i32, i32
  }
  func.func @transform_4(%arg0: i32) -> (i32, i32, i32) {
    %c0_i32 = arith.constant 0 : i32
    %c0_i32_0 = arith.constant 0 : i32
    %c0_i32_1 = arith.constant 0 : i32
    return %arg0, %c0_i32, %c0_i32_0 : i32, i32, i32
  }
}

</mosaic_0001>

<llo_original>
// kernel: tpu_custom_call.1
$region0: #{tpu_custom_call.1}
  #allocation0 [shape = 'u32[]', space=smem, size = 0x4, offset = 0x4, fixed_abs, tag = 'smem constant byte address 0x4 - core index']
  #allocation1 [shape = 'u32[72,128]{1,0:T(1,128)}', space=vmem, size = 0x9000, scoped, tag = 'internal scratch']
  %s0 = inlined_call_operand.vmem [shape: bf16[2,8,64], index: 0, kind: input, shape index: {}]
  %s1 = inlined_call_operand.vmem [shape: bf16[2,256,64], index: 1, kind: input, shape index: {}]
  %s2 = inlined_call_operand.vmem [shape: bf16[36,256], index: 2, kind: input, shape index: {}]
  %s3 = inlined_call_operand.vmem [shape: bf16[1,36], index: 3, kind: input, shape index: {}]
  %s4 = inlined_call_operand.hbm [shape: bf16[2,8,36], index: 4, kind: output, shape index: {}]
  %s5 = sld [smem:[#allocation0]]
  $region49: #{tpu_custom_call.1} parent=0
    _
  %s7 = ssub.s32 1, %s5
  %s8 = scalar_select 0, %s7, %s5
  $region1: #{tpu_custom_call.1} parent=0
    #allocation2 [shape = 'u8[4096]{0}', space=vmem, size = 0x1000, scoped, tag = 'output window, operand 0']
    #allocation3 [shape = 's32[2]{0}', space=sflag, size = 0x8, scoped, tag = 'scoped memory for tpu_custom_call.1']
    %9 = vsyncpa [#allocation3], 0
    %s10 = scalar_lea.sflag [#allocation3], 1
    %11 = vsyncpa %s10, 0
    loop: start=0, step=1, limit=4
    $region2: #{tpu_custom_call.1} parent=1 // loop_pre_header
      _
    $region3: #{tpu_custom_call.1} parent=1 // loop_header
      %s13 = sphi 0, %s17
      %p14 = scmp.ge.s32.totalorder %s13, 4
      %s23 = sphi 0, %s25
      %s26 = sphi 0, %s23
      %s27 = sphi 0, %s26
      %s43 = sphi 0, %s27
      %s49 = sphi 0, %s51
      %s52 = sphi 0, %s49
      %s53 = sphi 0, %s52
      %s69 = sphi 0, %s53
      %s73 = sphi 0, %s73
      %s75 = sphi 0, %s73
      %s76 = sphi 0, %s75
      %s90 = sphi 0, %s76
      %s94 = sphi 0, %s94
      %s96 = sphi 0, %s94
      %s97 = sphi 0, %s96
      %s111 = sphi 0, %s97
      %s117 = sphi 0, %s119
      %s120 = sphi 0, %s117
      %s121 = sphi 0, %s120
      %s137 = sphi 0, %s121
    $region4: #{tpu_custom_call.1} parent=1 // loop_header_branch
      %16 = sbr.rel (%p14) target = $region8
    $region5: #{tpu_custom_call.1} parent=1 // loop_body
      %s18 = ssub.s32 %s13, 1
      %s19 = ssub.s32 %s13, 2
      %s20 = sadd.s32 %s13, 1
      %s21 = ssub.s32 %s13, %s20
      %p22 = scmp.eq.s32.totalorder %s21, 0
      %s24 = sadd.s32 %s23, 1
      %s25 = scalar_select %p22, %s23, %s24
      %p28 = pneg %p22
      %p29 = scmp.eq.s32.totalorder %s13, 1
      %p30 = por %p28, %p29
      %p31 = scmp.ne.s32.totalorder %s23, %s26
      %p32 = scmp.eq.s32.totalorder %s13, 0
      %p33 = por %p31, %p32
      %p34 = scmp.ne.s32.totalorder %s23, %s26
      %p35 = scmp.eq.s32.totalorder %s18, 1
      %p36 = por %p34, %p35
      %p37 = scmp.ne.s32.totalorder %s26, %s27
      %p38 = scmp.eq.s32.totalorder %s18, 0
      %p39 = por %p37, %p38
      %p40 = scmp.ne.s32.totalorder %s26, %s27
      %p41 = scmp.eq.s32.totalorder %s19, 1
      %p42 = por %p40, %p41
      %p44 = scmp.ne.s32.totalorder %s27, %s43
      %p45 = scmp.eq.s32.totalorder %s19, 0
      %p46 = por %p44, %p45
      %s47 = ssub.s32 %s13, %s20
      %p48 = scmp.eq.s32.totalorder %s47, 0
      %s50 = sadd.s32 %s49, 1
      %s51 = scalar_select %p48, %s49, %s50
      %p54 = pneg %p48
      %p55 = scmp.eq.s32.totalorder %s13, 1
      %p56 = por %p54, %p55
      %p57 = scmp.ne.s32.totalorder %s49, %s52
      %p58 = scmp.eq.s32.totalorder %s13, 0
      %p59 = por %p57, %p58
      %p60 = scmp.ne.s32.totalorder %s49, %s52
      %p61 = scmp.eq.s32.totalorder %s18, 1
      %p62 = por %p60, %p61
      %p63 = scmp.ne.s32.totalorder %s52, %s53
      %p64 = scmp.eq.s32.totalorder %s18, 0
      %p65 = por %p63, %p64
      %p66 = scmp.ne.s32.totalorder %s52, %s53
      %p67 = scmp.eq.s32.totalorder %s19, 1
      %p68 = por %p66, %p67
      %p70 = scmp.ne.s32.totalorder %s53, %s69
      %p71 = scmp.eq.s32.totalorder %s19, 0
      %p72 = por %p70, %p71
      %s74 = sadd.s32 %s73, 1
      %p77 = scmp.eq.s32.totalorder %s13, 1
      %p78 = scmp.ne.s32.totalorder %s73, %s75
      %p79 = scmp.eq.s32.totalorder %s13, 0
      %p80 = por %p78, %p79
      %p81 = scmp.ne.s32.totalorder %s73, %s75
      %p82 = scmp.eq.s32.totalorder %s18, 1
      %p83 = por %p81, %p82
      %p84 = scmp.ne.s32.totalorder %s75, %s76
      %p85 = scmp.eq.s32.totalorder %s18, 0
      %p86 = por %p84, %p85
      %p87 = scmp.ne.s32.totalorder %s75, %s76
      %p88 = scmp.eq.s32.totalorder %s19, 1
      %p89 = por %p87, %p88
      %p91 = scmp.ne.s32.totalorder %s76, %s90
      %p92 = scmp.eq.s32.totalorder %s19, 0
      %p93 = por %p91, %p92
      %s95 = sadd.s32 %s94, 1
      %p98 = scmp.eq.s32.totalorder %s13, 1
      %p99 = scmp.ne.s32.totalorder %s94, %s96
      %p100 = scmp.eq.s32.totalorder %s13, 0
      %p101 = por %p99, %p100
      %p102 = scmp.ne.s32.totalorder %s94, %s96
      %p103 = scmp.eq.s32.totalorder %s18, 1
      %p104 = por %p102, %p103
      %p105 = scmp.ne.s32.totalorder %s96, %s97
      %p106 = scmp.eq.s32.totalorder %s18, 0
      %p107 = por %p105, %p106
      %p108 = scmp.ne.s32.totalorder %s96, %s97
      %p109 = scmp.eq.s32.totalorder %s19, 1
      %p110 = por %p108, %p109
      %p112 = scmp.ne.s32.totalorder %s97, %s111
      %p113 = scmp.eq.s32.totalorder %s19, 0
      %p114 = por %p112, %p113
      %s115 = ssub.s32 %s13, %s20
      %p116 = scmp.eq.s32.totalorder %s115, 0
      %s118 = sadd.s32 %s117, 1
      %s119 = scalar_select %p116, %s117, %s118
      %p122 = pneg %p116
      %p123 = scmp.eq.s32.totalorder %s13, 1
      %p124 = por %p122, %p123
      %p125 = scmp.ne.s32.totalorder %s117, %s120
      %p126 = scmp.eq.s32.totalorder %s13, 0
      %p127 = por %p125, %p126
      %p128 = scmp.ne.s32.totalorder %s117, %s120
      %p129 = scmp.eq.s32.totalorder %s18, 1
      %p130 = por %p128, %p129
      %p131 = scmp.ne.s32.totalorder %s120, %s121
      %p132 = scmp.eq.s32.totalorder %s18, 0
      %p133 = por %p131, %p132
      %p134 = scmp.ne.s32.totalorder %s120, %s121
      %p135 = scmp.eq.s32.totalorder %s19, 1
      %p136 = por %p134, %p135
      %p138 = scmp.ne.s32.totalorder %s121, %s137
      %p139 = scmp.eq.s32.totalorder %s19, 0
      %p140 = por %p138, %p139
      %p141 = scmp.le.s32.totalorder 1, %s13
      %p142 = scmp.lt.s32.totalorder %s13, 3
      %p143 = pnand %p141, %p142
      %p144 = pneg %p143
      // Predicated region
      $region9: #{tpu_custom_call.1} parent=5 // pred_check
        _
      $region10: #{tpu_custom_call.1} parent=5 // pred_check_branch
        %146 = sbr.rel (%p143) target = $region12
      $region11: #{tpu_custom_call.1} parent=5 // pred_region
        %s147 = ssub.s32 %s13, 1
        // Predicated region
        $region13: #{tpu_custom_call.1} parent=11 // pred_check
          %p148 = pneg %p86
        $region14: #{tpu_custom_call.1} parent=11 // pred_check_branch
          %150 = sbr.rel (%p148) target = $region16
        $region15: #{tpu_custom_call.1} parent=11 // pred_region
          _
        $region16: #{tpu_custom_call.1} parent=11 // pred_fallthru
          _
        // Predicated region
        $region17: #{tpu_custom_call.1} parent=11 // pred_check
          %p151 = pneg %p107
        $region18: #{tpu_custom_call.1} parent=11 // pred_check_branch
          %153 = sbr.rel (%p151) target = $region20
        $region19: #{tpu_custom_call.1} parent=11 // pred_region
          _
        $region20: #{tpu_custom_call.1} parent=11 // pred_fallthru
          _
      $region12: #{tpu_custom_call.1} parent=5 // pred_fallthru
        _
      %p154 = scmp.lt.s32.totalorder %s13, 2
      // Predicated region
      $region21: #{tpu_custom_call.1} parent=5 // pred_check
        %p155 = pneg %p154
      $region22: #{tpu_custom_call.1} parent=5 // pred_check_branch
        %157 = sbr.rel (%p155) target = $region24
      $region23: #{tpu_custom_call.1} parent=5 // pred_region
        // Predicated region
        $region25: #{tpu_custom_call.1} parent=23 // pred_check
          %p158 = pneg %p33
        $region26: #{tpu_custom_call.1} parent=23 // pred_check_branch
          %160 = sbr.rel (%p158) target = $region28
        $region27: #{tpu_custom_call.1} parent=23 // pred_region
          %p161 = scmp.lt.s32.totalorder %s13, 1
          %s162 = scalar_select %p161, %s13, 1
          %s163 = smul.addr %s162, 4
          %s164 = scalar_lea.vmem %s0, %s163
        $region28: #{tpu_custom_call.1} parent=23 // pred_fallthru
          _
        // Predicated region
        $region29: #{tpu_custom_call.1} parent=23 // pred_check
          %p165 = pneg %p59
        $region30: #{tpu_custom_call.1} parent=23 // pred_check_branch
          %167 = sbr.rel (%p165) target = $region32
        $region31: #{tpu_custom_call.1} parent=23 // pred_region
          %p168 = scmp.lt.s32.totalorder %s13, 1
          %s169 = scalar_select %p168, %s13, 1
          %s170 = smul.addr %s169, 32
          %s171 = smul.addr %s170, 4
          %s172 = scalar_lea.vmem %s1, %s171
        $region32: #{tpu_custom_call.1} parent=23 // pred_fallthru
          _
      $region24: #{tpu_custom_call.1} parent=5 // pred_fallthru
        _
      %p173 = scmp.le.s32.totalorder 1, %s13
      %p174 = scmp.lt.s32.totalorder %s13, 3
      %p175 = pnand %p173, %p174
      %p176 = pneg %p175
      // Predicated region
      $region33: #{tpu_custom_call.1} parent=5 // pred_check
        _
      $region34: #{tpu_custom_call.1} parent=5 // pred_check_branch
        %178 = sbr.rel (%p175) target = $region36
      $region35: #{tpu_custom_call.1} parent=5 // pred_region
        %s179 = ssub.s32 %s13, 1
        %p180 = scmp.lt.s32.totalorder %s18, 1
        %s181 = scalar_select %p180, %s18, 1
        %s182 = smul.addr %s181, 4
        %s183 = scalar_lea.vmem %s0, %s182
        %p184 = pneg %p39
        %p185 = pneg %p36
        %p186 = scmp.lt.s32.totalorder %s18, 1
        %s187 = scalar_select %p186, %s18, 1
        %s188 = smul.addr %s187, 32
        %s189 = smul.addr %s188, 4
        %s190 = scalar_lea.vmem %s1, %s189
        %p191 = pneg %p65
        %p192 = pneg %p62
        %p193 = pneg %p86
        %p194 = pneg %p83
        %p195 = pneg %p107
        %p196 = pneg %p104
        %p197 = pneg %p133
        %p198 = pneg %p130
        %s199 = sand.u32 %s120, 1
        %s200 = scalar_lea.sflag [#allocation3], %s199
        %s201 = sand.u32 %s120, 1
        %s202 = smul.addr %s201, 4
        %s203 = scalar_lea.vmem [#allocation2], %s202
        %p204 = scmp.lt.s32.totalorder %s18, 1
        %s205 = scalar_select %p204, %s18, 1
        %s206 = smul.addr %s205, 4
        %s207 = scalar_lea.vmem %s0, %s206
        %p208 = scmp.lt.s32.totalorder %s18, 1
        %s209 = scalar_select %p208, %s18, 1
        %s210 = smul.addr %s209, 32
        %s211 = smul.addr %s210, 4
        %s212 = scalar_lea.vmem %s1, %s211
        %v214 = vld [vmem:[%s207] sm:$0xf]
        %v215 = vld [vmem:[%s212] sm:$0xf]
        %v216 = vld [vmem:[%s212 + $0x4] sm:$0xf]
        %v217 = vld [vmem:[%s212 + $0x8] sm:$0xf]
        %v218 = vld [vmem:[%s212 + $0xc] sm:$0xf]
        %v219 = vld [vmem:[%s212 + $0x10] sm:$0xf]
        %v220 = vld [vmem:[%s212 + $0x14] sm:$0xf]
        %v221 = vld [vmem:[%s212 + $0x18] sm:$0xf]
        %v222 = vld [vmem:[%s212 + $0x1c] sm:$0xf]
        %v223 = vld [vmem:[%s212 + $0x20] sm:$0xf]
        %v224 = vld [vmem:[%s212 + $0x24] sm:$0xf]
        %v225 = vld [vmem:[%s212 + $0x28] sm:$0xf]
        %v226 = vld [vmem:[%s212 + $0x2c] sm:$0xf]
        %v227 = vld [vmem:[%s212 + $0x30] sm:$0xf]
        %v228 = vld [vmem:[%s212 + $0x34] sm:$0xf]
        %v229 = vld [vmem:[%s212 + $0x38] sm:$0xf]
        %v230 = vld [vmem:[%s212 + $0x3c] sm:$0xf]
        %v231 = vld [vmem:[%s212 + $0x40] sm:$0xf]
        %v232 = vld [vmem:[%s212 + $0x44] sm:$0xf]
        %v233 = vld [vmem:[%s212 + $0x48] sm:$0xf]
        %v234 = vld [vmem:[%s212 + $0x4c] sm:$0xf]
        %v235 = vld [vmem:[%s212 + $0x50] sm:$0xf]
        %v236 = vld [vmem:[%s212 + $0x54] sm:$0xf]
        %v237 = vld [vmem:[%s212 + $0x58] sm:$0xf]
        %v238 = vld [vmem:[%s212 + $0x5c] sm:$0xf]
        %v239 = vld [vmem:[%s212 + $0x60] sm:$0xf]
        %v240 = vld [vmem:[%s212 + $0x64] sm:$0xf]
        %v241 = vld [vmem:[%s212 + $0x68] sm:$0xf]
        %v242 = vld [vmem:[%s212 + $0x6c] sm:$0xf]
        %v243 = vld [vmem:[%s212 + $0x70] sm:$0xf]
        %v244 = vld [vmem:[%s212 + $0x74] sm:$0xf]
        %v245 = vld [vmem:[%s212 + $0x78] sm:$0xf]
        %v246 = vld [vmem:[%s212 + $0x7c] sm:$0xf]
        %v279 = vunpack.c.l.b16 %v215
        %v280 = vunpack.c.l.b16 %v216
        %v281 = vunpack.c.l.b16 %v217
        %v282 = vunpack.c.l.b16 %v218
        %v283 = vunpack.c.l.b16 %v219
        %v284 = vunpack.c.l.b16 %v220
        %v285 = vunpack.c.l.b16 %v221
        %v286 = vunpack.c.l.b16 %v222
        %v287 = vunpack.c.l.b16 %v223
        %v288 = vunpack.c.l.b16 %v224
        %v289 = vunpack.c.l.b16 %v225
        %v290 = vunpack.c.l.b16 %v226
        %v291 = vunpack.c.l.b16 %v227
        %v292 = vunpack.c.l.b16 %v228
        %v293 = vunpack.c.l.b16 %v229
        %v294 = vunpack.c.l.b16 %v230
        %v295 = vunpack.c.l.b16 %v231
        %v296 = vunpack.c.l.b16 %v232
        %v297 = vunpack.c.l.b16 %v233
        %v298 = vunpack.c.l.b16 %v234
        %v299 = vunpack.c.l.b16 %v235
        %v300 = vunpack.c.l.b16 %v236
        %v301 = vunpack.c.l.b16 %v237
        %v302 = vunpack.c.l.b16 %v238
        %v303 = vunpack.c.l.b16 %v239
        %v304 = vunpack.c.l.b16 %v240
        %v305 = vunpack.c.l.b16 %v241
        %v306 = vunpack.c.l.b16 %v242
        %v307 = vunpack.c.l.b16 %v243
        %v308 = vunpack.c.l.b16 %v244
        %v309 = vunpack.c.l.b16 %v245
        %v310 = vunpack.c.l.b16 %v246
        %v311 = vpack.c.b16 %v280, %v279
        %v312 = vpack.c.b16 %v282, %v281
        %v313 = vpack.c.b16 %v284, %v283
        %v314 = vpack.c.b16 %v286, %v285
        %v315 = vpack.c.b16 %v288, %v287
        %v316 = vpack.c.b16 %v290, %v289
        %v317 = vpack.c.b16 %v292, %v291
        %v318 = vpack.c.b16 %v294, %v293
        %v319 = vpack.c.b16 %v296, %v295
        %v320 = vpack.c.b16 %v298, %v297
        %v321 = vpack.c.b16 %v300, %v299
        %v322 = vpack.c.b16 %v302, %v301
        %v323 = vpack.c.b16 %v304, %v303
        %v324 = vpack.c.b16 %v306, %v305
        %v325 = vpack.c.b16 %v308, %v307
        %v326 = vpack.c.b16 %v310, %v309
        %vm327 = vcmask 523264
        %v329 = vsel %vm327, %v214, 0
        %v332 = vsel %vm327, %v311, 0
        %v335 = vsel %vm327, %v312, 0
        %v338 = vsel %vm327, %v313, 0
        %v341 = vsel %vm327, %v314, 0
        %v344 = vsel %vm327, %v315, 0
        %v347 = vsel %vm327, %v316, 0
        %v350 = vsel %vm327, %v317, 0
        %v353 = vsel %vm327, %v318, 0
        %v356 = vsel %vm327, %v319, 0
        %v359 = vsel %vm327, %v320, 0
        %v362 = vsel %vm327, %v321, 0
        %v365 = vsel %vm327, %v322, 0
        %v368 = vsel %vm327, %v323, 0
        %v371 = vsel %vm327, %v324, 0
        %v374 = vsel %vm327, %v325, 0
        %v377 = vsel %vm327, %v326, 0
        %379 = vmatpush.bf16.xpose.msra.mxu0 %v353
        %380 = vmatpush.bf16.xpose.msra.mxu0 %v350
        %381 = vmatpush.bf16.xpose.msra.mxu0 %v347
        %382 = vmatpush.bf16.xpose.msra.mxu0 %v344
        %383 = vmatpush.bf16.xpose.msra.mxu0 %v341
        %384 = vmatpush.bf16.xpose.msra.mxu0 %v338
        %385 = vmatpush.bf16.xpose.msra.mxu0 %v335
        %386 = vmatpush.bf16.xpose.msra.mxu0 %v332
        %387 = vmatmul.bf16.gmra.mxu0 %v329
        %v388 = vpop.f32.mrf.mxu0
        %v389 = vadd.f32 0.0, %v388
        %v390 = vpop.f32.mrf.mxu0
        %391 = vdwg.mxu0
        %392 = vmatpush.bf16.xpose.msra.mxu0 %v377
        %393 = vmatpush.bf16.xpose.msra.mxu0 %v374
        %394 = vmatpush.bf16.xpose.msra.mxu0 %v371
        %395 = vmatpush.bf16.xpose.msra.mxu0 %v368
        %396 = vmatpush.bf16.xpose.msra.mxu0 %v365
        %397 = vmatpush.bf16.xpose.msra.mxu0 %v362
        %398 = vmatpush.bf16.xpose.msra.mxu0 %v359
        %399 = vmatpush.bf16.xpose.msra.mxu0 %v356
        %400 = vmatmul.bf16.gmra.mxu0 %v329
        %v401 = vpop.f32.mrf.mxu0
        %v402 = vadd.f32 0.0, %v401
        %v403 = vpop.f32.mrf.mxu0
        %404 = vdwg.mxu0
        %v405 = vpack.c.bf16 %v389, %v389
        %v406 = vpack.c.bf16 %v402, %v402
        %v407 = vld [vmem:[%s2] sm:$0xff]
        %v408 = vld [vmem:[%s2 + $0x8] sm:$0xff]
        %v409 = vld [vmem:[%s2 + $0x10] sm:$0xff]
        %v410 = vld [vmem:[%s2 + $0x18] sm:$0xff]
        %v411 = vld [vmem:[%s2 + $0x20] sm:$0x33]
        %v412 = vld [vmem:[%s3] sm:$0x1]
        %v413 = vunpack.c.l.bf16 %v412
        %v414 = vperm.slane %v413, 0
        %v420 = vunpack.c.l.b16 %v407
        %v421 = vunpack.c.h.b16 %v407
        %v422 = vunpack.c.l.b16 %v408
        %v423 = vunpack.c.h.b16 %v408
        %v424 = vunpack.c.l.b16 %v409
        %v425 = vunpack.c.h.b16 %v409
        %v426 = vunpack.c.l.b16 %v410
        %v427 = vunpack.c.h.b16 %v410
        %v428 = vunpack.c.l.b16 %v411
        %v429 = vunpack.c.h.b16 %v411
        %v430 = vpack.c.b16 %v422, %v420
        %v431 = vpack.c.b16 %v423, %v421
        %v432 = vpack.c.b16 %v426, %v424
        %v433 = vpack.c.b16 %v427, %v425
        %v434 = vpack.c.b16 %v428, %v428
        %v435 = vpack.c.b16 %v429, %v429
        %442 = vmatpush.bf16.xpose.msra.mxu0 0
        %443 = vmatpush.bf16.xpose.msra.mxu0 0
        %444 = vmatpush.bf16.xpose.msra.mxu0 0
        %445 = vmatpush.bf16.xpose.msra.mxu0 0
        %446 = vmatpush.bf16.xpose.msra.mxu0 0
        %447 = vmatpush.bf16.xpose.msra.mxu0 %v434
        %448 = vmatpush.bf16.xpose.msra.mxu0 %v432
        %449 = vmatpush.bf16.xpose.msra.mxu0 %v430
        %450 = vmatmul.bf16.gmra.mxu0 %v405
        %v451 = vpop.f32.mrf.mxu0
        %v452 = vadd.f32 %v414, %v451
        %v453 = vpop.f32.mrf.mxu0
        %454 = vdwg.mxu0
        %455 = vmatpush.bf16.xpose.msra.mxu0 0
        %456 = vmatpush.bf16.xpose.msra.mxu0 0
        %457 = vmatpush.bf16.xpose.msra.mxu0 0
        %458 = vmatpush.bf16.xpose.msra.mxu0 0
        %459 = vmatpush.bf16.xpose.msra.mxu0 0
        %460 = vmatpush.bf16.xpose.msra.mxu0 %v435
        %461 = vmatpush.bf16.xpose.msra.mxu0 %v433
        %462 = vmatpush.bf16.xpose.msra.mxu0 %v431
        %463 = vmatmul.bf16.gmra.mxu0 %v406
        %v464 = vpop.f32.mrf.mxu0
        %v465 = vadd.f32 %v452, %v464
        %v466 = vpop.f32.mrf.mxu0
        %467 = vdwg.mxu0
        %v468 = vpack.c.bf16 %v465, %v465
        %vm469 = vcmask 289792
        %470 = vst.msk [vmem:[%s203] sm:$0xf] %vm469, %v468
        %s471 = sand.u32 %s120, 1
        %s472 = scalar_lea.sflag [#allocation3], %s471
        %s473 = sand.u32 %s120, 1
        %s474 = smul.addr %s473, 4
        %s475 = scalar_lea.vmem [#allocation2], %s474
        // Predicated region
        $region37: #{tpu_custom_call.1} parent=35 // pred_check
          %p476 = pneg %p130
        $region38: #{tpu_custom_call.1} parent=35 // pred_check_branch
          %478 = sbr.rel (%p476) target = $region40
        $region39: #{tpu_custom_call.1} parent=35 // pred_region
          %480 = vsyncadd %s472, 0
          %s481 = smul.addr %s18, 4
          %s482 = scalar_lea.hbm %s4, %s481
          %s484 = sshll.u32 %s475, 4
          %s485 = int_to_ptr.vmem [resolvable:$true] %s484
          %s486 = sshll.u32 %s482, 4
          %s487 = int_to_ptr.hbm [resolvable:$true] %s486
          %489 = dma.vmem_to_hbm [thread:$0]  %s485, 64, %s487, %s472
        $region40: #{tpu_custom_call.1} parent=35 // pred_fallthru
          _
      $region36: #{tpu_custom_call.1} parent=5 // pred_fallthru
        _
      %p490 = scmp.le.s32.totalorder 2, %s13
      // Predicated region
      $region41: #{tpu_custom_call.1} parent=5 // pred_check
        %p491 = pneg %p490
      $region42: #{tpu_custom_call.1} parent=5 // pred_check_branch
        %493 = sbr.rel (%p491) target = $region44
      $region43: #{tpu_custom_call.1} parent=5 // pred_region
        %s494 = ssub.s32 %s13, 2
        // Predicated region
        $region45: #{tpu_custom_call.1} parent=43 // pred_check
          %p495 = pneg %p136
        $region46: #{tpu_custom_call.1} parent=43 // pred_check_branch
          %497 = sbr.rel (%p495) target = $region48
        $region47: #{tpu_custom_call.1} parent=43 // pred_region
          %s498 = sand.u32 %s121, 1
          %s499 = scalar_lea.sflag [#allocation3], %s498
          %s500 = sand.u32 %s121, 1
          %s501 = smul.addr %s500, 4
          %s502 = scalar_lea.vmem [#allocation2], %s501
          %504 = dma.done %s499, 64
        $region48: #{tpu_custom_call.1} parent=43 // pred_fallthru
          _
      $region44: #{tpu_custom_call.1} parent=5 // pred_fallthru
        _
    $region6: #{tpu_custom_call.1} parent=1 // loop_footer
      %s17 = sadd.s32 1, %s13
    $region7: #{tpu_custom_call.1} parent=1 // loop_footer_branch
      %12 = sbr.rel target = $region3
    $region8: #{tpu_custom_call.1} parent=1 // loop_exit
      _
    %505 = vsyncpa [#allocation3], 1
    %s506 = scalar_lea.sflag [#allocation3], 1
    %507 = vsyncpa %s506, 1

</llo_original>
